<compile_context>
chip_gen: v5e
topology: v5e:2x2
jax: 0.10.0
libtpu: 0.0.40
codegen_flags: <defaults>
</compile_context>

<pallas_src>
import functools

import numpy as np
import jax
import jax.numpy as jnp
from jax import lax
from jax.experimental import pallas as pl
from jax.experimental.pallas import tpu as pltpu


# MXU operand precision: bf16 inputs + f32 accumulation is native on every TPU
# generation.  Set to jnp.float32 for (near) bit-accurate results.
_MM_DTYPE = jnp.bfloat16

_CP = 8  # conv input channels padded to one full 8-sublane tile


def _backbone_kernel(x_ref, w1_ref, w2_ref, sel_ref, mask_ref, o_ref, *, H, W, N):
    """Fused conv1(3x3,s1,p1)+ReLU + conv2(3x3,s2,p1)+ReLU, batch folded into lanes.

    x_ref:    (CP, N*H*W)         f32   input, channels zero-padded to CP
    w1_ref:   (C1, 9*CP + CP)     bf16  im2col weights | bias col | zero cols
    w2_ref:   (C2, 9*C1 + C1)     bf16  im2col weights | bias col | zero cols
    sel_ref:  (N*H*W, N*Ho*Wo)    bf16  block-diagonal stride-2 selection (0/1)
    mask_ref: (9*CP + CP, N*H*W)  f32   boundary mask (last CP rows = 1 for bias)
    o_ref:    (C2, N*Ho*Wo)       f32
    """
    HW = H * W
    L = N * HW
    x = x_ref[...]
    mask = mask_ref[...]                       # loaded once, reused by both convs
    ones = jnp.ones((_CP, L), jnp.float32)     # bias rows of the patch matrix

    def im2col(v):
        # 9 taps as XLU lane rotations.  roll follows jnp.roll semantics
        # (result[m] = v[(m - shift) % L]), so shift = (-s) % L gives v[m + s].
        # Wrapped / cross-image lanes are exactly the ones killed by the mask.
        taps = []
        for kh in range(3):
            for kw in range(3):
                s = (kh - 1) * W + (kw - 1)
                taps.append(v if s == 0 else pltpu.roll(v, shift=(-s) % L, axis=1))
        p = jnp.concatenate(taps + [ones], axis=0)        # (9*CP + CP, L)
        return (p * mask).astype(_MM_DTYPE)               # single mask pass + cast

    # conv1 (stride 1) + folded bias + ReLU, evaluated for all N*H*W positions.
    p1 = im2col(x)
    y1 = jnp.maximum(
        jnp.dot(w1_ref[...], p1, preferred_element_type=jnp.float32), 0.0)

    # conv2 (stride 2): pick the stride-2 patch columns first (fewer MXU tile
    # passes, smaller live accumulator), then one small matmul + bias + ReLU.
    p2 = im2col(y1)
    p2s = jnp.dot(p2, sel_ref[...], preferred_element_type=jnp.float32)
    y2 = jnp.maximum(
        jnp.dot(w2_ref[...], p2s.astype(_MM_DTYPE),
                preferred_element_type=jnp.float32), 0.0)
    o_ref[...] = y2.astype(o_ref.dtype)


def _conv_mask_np(N, H, W, cp):
    """(9*cp + cp, N*H*W) boundary mask; last cp rows are 1.0 (folded-bias rows)."""
    HW = H * W
    L = N * HW
    lane = np.arange(L)
    row = (lane % HW) // W
    col = lane % W
    mask = np.empty((9 * cp + cp, L), np.float32)
    for kh in range(3):
        for kw in range(3):
            dr, dc = kh - 1, kw - 1
            valid = ((row + dr >= 0) & (row + dr < H) &
                     (col + dc >= 0) & (col + dc < W))
            t = kh * 3 + kw
            mask[t * cp:(t + 1) * cp, :] = valid.astype(np.float32)[None, :]
    mask[9 * cp:, :] = 1.0
    return mask


def _stride2_sel_np(N, H, W):
    """(N*H*W, N*Ho*Wo) block-diagonal 0/1 matrix picking even rows/cols per image."""
    HW = H * W
    Ho = (H - 1) // 2 + 1
    Wo = (W - 1) // 2 + 1
    Lo = N * Ho * Wo
    o = np.arange(Lo)
    n = o // (Ho * Wo)
    oi = (o % (Ho * Wo)) // Wo
    oj = o % Wo
    src = n * HW + (2 * oi) * W + 2 * oj
    sel = np.zeros((N * HW, Lo), np.float32)
    sel[src, o] = 1.0
    return sel


def _augment_weights(w_oihw, b, cin_pad):
    """(Cout,Cin,3,3),(Cout,) -> (Cout, 9*cin_pad + cin_pad): im2col | bias | zeros."""
    cout, cin = w_oihw.shape[0], w_oihw.shape[1]
    w = jnp.pad(w_oihw, ((0, 0), (0, cin_pad - cin), (0, 0), (0, 0)))
    # column index k = (kh*3 + kw)*cin_pad + cin  (matches the in-kernel patch rows)
    w = jnp.transpose(w, (0, 2, 3, 1)).reshape(cout, 9 * cin_pad)
    extra = jnp.concatenate(
        [b.reshape(cout, 1), jnp.zeros((cout, cin_pad - 1), w.dtype)], axis=1)
    return jnp.concatenate([w, extra], axis=1).astype(_MM_DTYPE)


@jax.jit
def backbone_forward(x_nchw, params):
    """Backbone.forward: l1 (conv1 -> relu -> conv2(s2) -> relu) then x.view(N, -1)."""
    N, Cin, H, W = x_nchw.shape
    C1 = params["w1"].shape[0]
    C2 = params["w2"].shape[0]
    assert Cin <= _CP and C1 == _CP, "layout assumes 8-channel (one sublane tile) convs"
    Ho = (H - 1) // 2 + 1
    Wo = (W - 1) // 2 + 1

    # (N, Cin, H, W) -> (CP, N*H*W): batch folded into the lane dim (tiny one-time
    # relayout done by XLA), channels zero-padded to a full 8-sublane tile.
    x2d = jnp.transpose(x_nchw, (1, 0, 2, 3)).reshape(Cin, N * H * W)
    x2d = jnp.pad(x2d, ((0, _CP - Cin), (0, 0)))

    w1a = _augment_weights(params["w1"], params["b1"], _CP)      # (C1, 80)
    w2a = _augment_weights(params["w2"], params["b2"], C1)       # (C2, 80)
    sel = jnp.asarray(_stride2_sel_np(N, H, W), _MM_DTYPE)       # (N*H*W, N*Ho*Wo)
    mask = jnp.asarray(_conv_mask_np(N, H, W, _CP))              # (80, N*H*W) f32

    # Single grid-less pallas_call: everything fits VMEM, one invocation, output
    # tile is (C2, N*Ho*Wo) = lane-dense (128 lanes) -> unmasked stores.
    out = pl.pallas_call(
        functools.partial(_backbone_kernel, H=H, W=W, N=N),
        out_shape=jax.ShapeDtypeStruct((C2, N * Ho * Wo), x_nchw.dtype),
    )(x2d, w1a, w2a, sel, mask)

    # (C2, N*Ho*Wo) -> (N, C2*Ho*Wo): same element order as torch's view(N, -1).
    return out.reshape(C2, N, Ho * Wo).transpose(1, 0, 2).reshape(N, -1)


def reference_forward(x_nchw, params):
    """Pure-JAX (lax.conv, f32 HIGHEST) reference of the same backbone."""
    dn1 = lax.conv_dimension_numbers(x_nchw.shape, params["w1"].shape,
                                     ("NCHW", "OIHW", "NCHW"))
    y = lax.conv_general_dilated(x_nchw, params["w1"], (1, 1), ((1, 1), (1, 1)),
                                 dimension_numbers=dn1,
                                 precision=lax.Precision.HIGHEST)
    y = jax.nn.relu(y + params["b1"].reshape(1, -1, 1, 1))
    dn2 = lax.conv_dimension_numbers(y.shape, params["w2"].shape,
                                     ("NCHW", "OIHW", "NCHW"))
    y = lax.conv_general_dilated(y, params["w2"], (2, 2), ((1, 1), (1, 1)),
                                 dimension_numbers=dn2,
                                 precision=lax.Precision.HIGHEST)
    y = jax.nn.relu(y + params["b2"].reshape(1, -1, 1, 1))
    return y.reshape(y.shape[0], -1)


if __name__ == "__main__":
    N, Cin, H, W = 2, 4, 16, 16
    C1, C2 = 8, 16

    key = jax.random.PRNGKey(0)
    kx, k1, k2, k3, k4 = jax.random.split(key, 5)
    x = jax.random.normal(kx, (N, Cin, H, W), jnp.float32)
    params = {
        "w1": 0.1 * jax.random.normal(k1, (C1, Cin, 3, 3), jnp.float32),   # OIHW
        "b1": 0.1 * jax.random.normal(k2, (C1,), jnp.float32),
        "w2": 0.1 * jax.random.normal(k3, (C2, C1, 3, 3), jnp.float32),    # OIHW
        "b2": 0.1 * jax.random.normal(k4, (C2,), jnp.float32),
    }

    out = backbone_forward(x, params)
    out = jax.block_until_ready(out)

    assert out.shape == (N, C2 * (H // 2) * (W // 2)), out.shape   # (2, 1024)

    ref = reference_forward(x, params)
    # bf16 MXU operands (f32 accumulate) vs the f32 HIGHEST reference: observed
    # error is ~1e-3 absolute; tolerance below keeps a large margin.
    np.testing.assert_allclose(np.asarray(out), np.asarray(ref), rtol=2e-2, atol=2e-2)

    print("KERNEL_OK")
</pallas_src>

<mosaic_0001>
module attributes {stable_mosaic.version = 11 : i64} {
  func.func @_backbone_kernel(%arg0: memref<8x512xf32, #tpu.memory_space<vmem>>, %arg1: memref<8x80xbf16, #tpu.memory_space<vmem>>, %arg2: memref<16x80xbf16, #tpu.memory_space<vmem>>, %arg3: memref<512x128xbf16, #tpu.memory_space<vmem>>, %arg4: memref<80x512xf32, #tpu.memory_space<vmem>>, %arg5: memref<16x128xf32, #tpu.memory_space<vmem>>) attributes {dimension_semantics = [], scalar_prefetch = 0 : i64, scratch_operands = 0 : i64, tpu.core_type = #tpu.core_type<tc>} {
    %c0 = arith.constant 0 : index
    %c0_0 = arith.constant 0 : index
    %0 = vector.load %arg0[%c0, %c0_0] : memref<8x512xf32, #tpu.memory_space<vmem>>, vector<8x512xf32>
    %c0_1 = arith.constant 0 : index
    %c0_2 = arith.constant 0 : index
    %1 = vector.load %arg4[%c0_1, %c0_2] : memref<80x512xf32, #tpu.memory_space<vmem>>, vector<80x512xf32>
    %cst = arith.constant 1.000000e+00 : f32
    %2 = vector.broadcast %cst : f32 to vector<8x512xf32>
    %c17_i32 = arith.constant 17 : i32
    %3 = tpu.dynamic_rotate %0 by %c17_i32 dim 1 : vector<8x512xf32>, i32 -> vector<8x512xf32>
    %c16_i32 = arith.constant 16 : i32
    %4 = tpu.dynamic_rotate %0 by %c16_i32 dim 1 : vector<8x512xf32>, i32 -> vector<8x512xf32>
    %c15_i32 = arith.constant 15 : i32
    %5 = tpu.dynamic_rotate %0 by %c15_i32 dim 1 : vector<8x512xf32>, i32 -> vector<8x512xf32>
    %c1_i32 = arith.constant 1 : i32
    %6 = tpu.dynamic_rotate %0 by %c1_i32 dim 1 : vector<8x512xf32>, i32 -> vector<8x512xf32>
    %c511_i32 = arith.constant 511 : i32
    %7 = tpu.dynamic_rotate %0 by %c511_i32 dim 1 : vector<8x512xf32>, i32 -> vector<8x512xf32>
    %c497_i32 = arith.constant 497 : i32
    %8 = tpu.dynamic_rotate %0 by %c497_i32 dim 1 : vector<8x512xf32>, i32 -> vector<8x512xf32>
    %c496_i32 = arith.constant 496 : i32
    %9 = tpu.dynamic_rotate %0 by %c496_i32 dim 1 : vector<8x512xf32>, i32 -> vector<8x512xf32>
    %c495_i32 = arith.constant 495 : i32
    %10 = tpu.dynamic_rotate %0 by %c495_i32 dim 1 : vector<8x512xf32>, i32 -> vector<8x512xf32>
    %11 = tpu.concatenate %3, %4, %5, %6, %0, %7, %8, %9, %10, %2 in 0 : vector<8x512xf32>, vector<8x512xf32>, vector<8x512xf32>, vector<8x512xf32>, vector<8x512xf32>, vector<8x512xf32>, vector<8x512xf32>, vector<8x512xf32>, vector<8x512xf32>, vector<8x512xf32> -> vector<80x512xf32>
    %12 = arith.mulf %11, %1 : vector<80x512xf32>
    %13 = arith.truncf %12 : vector<80x512xf32> to vector<80x512xbf16>
    %c0_3 = arith.constant 0 : index
    %c0_4 = arith.constant 0 : index
    %14 = vector.load %arg1[%c0_3, %c0_4] : memref<8x80xbf16, #tpu.memory_space<vmem>>, vector<8x80xbf16>
    %cst_5 = arith.constant dense<0.000000e+00> : vector<8x512xf32>
    %15 = tpu.matmul %14, %13, %cst_5 {dimension_numbers = #tpu.dot_dimension_numbers<[1], [0], [0], [1], [0, 0, 1, 1], [], []>} : vector<8x80xbf16>, vector<80x512xbf16>, vector<8x512xf32> -> vector<8x512xf32>
    %cst_6 = arith.constant 0.000000e+00 : f32
    %16 = vector.broadcast %cst_6 : f32 to vector<8x512xf32>
    %17 = arith.maximumf %15, %16 : vector<8x512xf32>
    %c17_i32_7 = arith.constant 17 : i32
    %18 = tpu.dynamic_rotate %17 by %c17_i32_7 dim 1 : vector<8x512xf32>, i32 -> vector<8x512xf32>
    %c16_i32_8 = arith.constant 16 : i32
    %19 = tpu.dynamic_rotate %17 by %c16_i32_8 dim 1 : vector<8x512xf32>, i32 -> vector<8x512xf32>
    %c15_i32_9 = arith.constant 15 : i32
    %20 = tpu.dynamic_rotate %17 by %c15_i32_9 dim 1 : vector<8x512xf32>, i32 -> vector<8x512xf32>
    %c1_i32_10 = arith.constant 1 : i32
    %21 = tpu.dynamic_rotate %17 by %c1_i32_10 dim 1 : vector<8x512xf32>, i32 -> vector<8x512xf32>
    %c511_i32_11 = arith.constant 511 : i32
    %22 = tpu.dynamic_rotate %17 by %c511_i32_11 dim 1 : vector<8x512xf32>, i32 -> vector<8x512xf32>
    %c497_i32_12 = arith.constant 497 : i32
    %23 = tpu.dynamic_rotate %17 by %c497_i32_12 dim 1 : vector<8x512xf32>, i32 -> vector<8x512xf32>
    %c496_i32_13 = arith.constant 496 : i32
    %24 = tpu.dynamic_rotate %17 by %c496_i32_13 dim 1 : vector<8x512xf32>, i32 -> vector<8x512xf32>
    %c495_i32_14 = arith.constant 495 : i32
    %25 = tpu.dynamic_rotate %17 by %c495_i32_14 dim 1 : vector<8x512xf32>, i32 -> vector<8x512xf32>
    %26 = tpu.concatenate %18, %19, %20, %21, %17, %22, %23, %24, %25, %2 in 0 : vector<8x512xf32>, vector<8x512xf32>, vector<8x512xf32>, vector<8x512xf32>, vector<8x512xf32>, vector<8x512xf32>, vector<8x512xf32>, vector<8x512xf32>, vector<8x512xf32>, vector<8x512xf32> -> vector<80x512xf32>
    %27 = arith.mulf %26, %1 : vector<80x512xf32>
    %28 = arith.truncf %27 : vector<80x512xf32> to vector<80x512xbf16>
    %c0_15 = arith.constant 0 : index
    %c0_16 = arith.constant 0 : index
    %29 = vector.load %arg3[%c0_15, %c0_16] : memref<512x128xbf16, #tpu.memory_space<vmem>>, vector<512x128xbf16>
    %cst_17 = arith.constant dense<0.000000e+00> : vector<80x128xf32>
    %30 = tpu.matmul %28, %29, %cst_17 {dimension_numbers = #tpu.dot_dimension_numbers<[1], [0], [0], [1], [0, 0, 1, 1], [], []>} : vector<80x512xbf16>, vector<512x128xbf16>, vector<80x128xf32> -> vector<80x128xf32>
    %c0_18 = arith.constant 0 : index
    %c0_19 = arith.constant 0 : index
    %31 = vector.load %arg2[%c0_18, %c0_19] : memref<16x80xbf16, #tpu.memory_space<vmem>>, vector<16x80xbf16>
    %32 = arith.truncf %30 : vector<80x128xf32> to vector<80x128xbf16>
    %cst_20 = arith.constant dense<0.000000e+00> : vector<16x128xf32>
    %33 = tpu.matmul %31, %32, %cst_20 {dimension_numbers = #tpu.dot_dimension_numbers<[1], [0], [0], [1], [0, 0, 1, 1], [], []>} : vector<16x80xbf16>, vector<80x128xbf16>, vector<16x128xf32> -> vector<16x128xf32>
    %cst_21 = arith.constant 0.000000e+00 : f32
    %34 = vector.broadcast %cst_21 : f32 to vector<16x128xf32>
    %35 = arith.maximumf %33, %34 : vector<16x128xf32>
    %c0_22 = arith.constant 0 : index
    %c0_23 = arith.constant 0 : index
    %36 = vector.load %arg5[%c0_22, %c0_23] : memref<16x128xf32, #tpu.memory_space<vmem>>, vector<16x128xf32>
    tpu.vector_store %arg5[%c0_22, %c0_23], %35 {strides = array<i32>} : memref<16x128xf32, #tpu.memory_space<vmem>>, vector<16x128xf32>,
    return
  }
}

</mosaic_0001>

<llo_original>
// kernel: backbone_forward.1
$region0: #{backbone_forward.1}
  #allocation0 [shape = 'u32[]', space=smem, size = 0x4, offset = 0x4, fixed_abs, tag = 'smem constant byte address 0x4 - core index']
  #allocation1 [shape = 'u32[72,128]{1,0:T(1,128)}', space=vmem, size = 0x9000, scoped, tag = 'internal scratch']
  %s0 = inlined_call_operand.vmem [shape: f32[8,512], index: 0, kind: input, shape index: {}]
  %s1 = inlined_call_operand.vmem [shape: bf16[8,80], index: 1, kind: input, shape index: {}]
  %s2 = inlined_call_operand.vmem [shape: bf16[16,80], index: 2, kind: input, shape index: {}]
  %s3 = inlined_call_operand.hbm [shape: bf16[512,128], index: 3, kind: input, shape index: {}]
  %s4 = inlined_call_operand.vmem [shape: f32[80,512], index: 4, kind: input, shape index: {}]
  %s5 = inlined_call_operand.vmem [shape: f32[16,128], index: 5, kind: output, shape index: {}]
  %s6 = sld [smem:[#allocation0]]
  $region34: #{backbone_forward.1} parent=0
    _
  %s8 = ssub.s32 1, %s6
  %s9 = scalar_select 0, %s8, %s6
  $region1: #{backbone_forward.1} parent=0
    #allocation2 [shape = 'u8[131072]{0}', space=vmem, size = 0x20000, scoped, tag = 'input window, operand 3, single buffered']
    #allocation3 [shape = 's32[1]{0}', space=sflag, size = 0x4, scoped, tag = 'scoped memory for backbone_forward.1']
    %10 = vsyncpa [#allocation3], 0
    // Predicated region
    $region2: #{backbone_forward.1} parent=1 // pred_check
      _
    $region3: #{backbone_forward.1} parent=1 // pred_check_branch
      %12 = sbr.rel (0) target = $region5
    $region4: #{backbone_forward.1} parent=1 // pred_region
      _
    $region5: #{backbone_forward.1} parent=1 // pred_fallthru
      _
    // Predicated region
    $region6: #{backbone_forward.1} parent=1 // pred_check
      _
    $region7: #{backbone_forward.1} parent=1 // pred_check_branch
      %14 = sbr.rel (0) target = $region9
    $region8: #{backbone_forward.1} parent=1 // pred_region
      _
    $region9: #{backbone_forward.1} parent=1 // pred_fallthru
      _
    // Predicated region
    $region10: #{backbone_forward.1} parent=1 // pred_check
      _
    $region11: #{backbone_forward.1} parent=1 // pred_check_branch
      %16 = sbr.rel (0) target = $region13
    $region12: #{backbone_forward.1} parent=1 // pred_region
      _
    $region13: #{backbone_forward.1} parent=1 // pred_fallthru
      _
    // Predicated region
    $region14: #{backbone_forward.1} parent=1 // pred_check
      _
    $region15: #{backbone_forward.1} parent=1 // pred_check_branch
      %18 = sbr.rel (0) target = $region17
    $region16: #{backbone_forward.1} parent=1 // pred_region
      %20 = vsyncadd [#allocation3], 0
      %s21 = sshll.u32 %s3, 4
      %s22 = int_to_ptr.hbm [resolvable:$true] %s21
      %s23 = sshll.u32 [#allocation2], 4
      %s24 = int_to_ptr.vmem [resolvable:$true] %s23
      %29 = dma.hbm_to_vmem [thread:$0]  %s22, 4096, %s24, [#allocation3], 64, 64, 4
    $region17: #{backbone_forward.1} parent=1 // pred_fallthru
      _
    // Predicated region
    $region18: #{backbone_forward.1} parent=1 // pred_check
      _
    $region19: #{backbone_forward.1} parent=1 // pred_check_branch
      %31 = sbr.rel (0) target = $region21
    $region20: #{backbone_forward.1} parent=1 // pred_region
      _
    $region21: #{backbone_forward.1} parent=1 // pred_fallthru
      _
    // Predicated region
    $region22: #{backbone_forward.1} parent=1 // pred_check
      _
    $region23: #{backbone_forward.1} parent=1 // pred_check_branch
      %33 = sbr.rel (0) target = $region25
    $region24: #{backbone_forward.1} parent=1 // pred_region
      %35 = dma.done [#allocation3], 4096
    $region25: #{backbone_forward.1} parent=1 // pred_fallthru
      _
    %v37 = vld [vmem:[%s0] sm:$0xff]
    %v38 = vld [vmem:[%s0 + $0x8] sm:$0xff]
    %v39 = vld [vmem:[%s0 + $0x10] sm:$0xff]
    %v40 = vld [vmem:[%s0 + $0x18] sm:$0xff]
    %v41 = vld [vmem:[%s4] sm:$0xff]
    %v42 = vld [vmem:[%s4 + $0x8] sm:$0xff]
    %v43 = vld [vmem:[%s4 + $0x10] sm:$0xff]
    %v44 = vld [vmem:[%s4 + $0x18] sm:$0xff]
    %v45 = vld [vmem:[%s4 + $0x20] sm:$0xff]
    %v46 = vld [vmem:[%s4 + $0x28] sm:$0xff]
    %v47 = vld [vmem:[%s4 + $0x30] sm:$0xff]
    %v48 = vld [vmem:[%s4 + $0x38] sm:$0xff]
    %v49 = vld [vmem:[%s4 + $0x40] sm:$0xff]
    %v50 = vld [vmem:[%s4 + $0x48] sm:$0xff]
    %v51 = vld [vmem:[%s4 + $0x50] sm:$0xff]
    %v52 = vld [vmem:[%s4 + $0x58] sm:$0xff]
    %v53 = vld [vmem:[%s4 + $0x60] sm:$0xff]
    %v54 = vld [vmem:[%s4 + $0x68] sm:$0xff]
    %v55 = vld [vmem:[%s4 + $0x70] sm:$0xff]
    %v56 = vld [vmem:[%s4 + $0x78] sm:$0xff]
    %v57 = vld [vmem:[%s4 + $0x80] sm:$0xff]
    %v58 = vld [vmem:[%s4 + $0x88] sm:$0xff]
    %v59 = vld [vmem:[%s4 + $0x90] sm:$0xff]
    %v60 = vld [vmem:[%s4 + $0x98] sm:$0xff]
    %v61 = vld [vmem:[%s4 + $0xa0] sm:$0xff]
    %v62 = vld [vmem:[%s4 + $0xa8] sm:$0xff]
    %v63 = vld [vmem:[%s4 + $0xb0] sm:$0xff]
    %v64 = vld [vmem:[%s4 + $0xb8] sm:$0xff]
    %v65 = vld [vmem:[%s4 + $0xc0] sm:$0xff]
    %v66 = vld [vmem:[%s4 + $0xc8] sm:$0xff]
    %v67 = vld [vmem:[%s4 + $0xd0] sm:$0xff]
    %v68 = vld [vmem:[%s4 + $0xd8] sm:$0xff]
    %v69 = vld [vmem:[%s4 + $0xe0] sm:$0xff]
    %v70 = vld [vmem:[%s4 + $0xe8] sm:$0xff]
    %v71 = vld [vmem:[%s4 + $0xf0] sm:$0xff]
    %v72 = vld [vmem:[%s4 + $0xf8] sm:$0xff]
    %v73 = vld [vmem:[%s4 + $0x100] sm:$0xff]
    %v74 = vld [vmem:[%s4 + $0x108] sm:$0xff]
    %v75 = vld [vmem:[%s4 + $0x110] sm:$0xff]
    %v76 = vld [vmem:[%s4 + $0x118] sm:$0xff]
    %v77 = vld [vmem:[%s4 + $0x120] sm:$0xff]
    %v78 = vld [vmem:[%s4 + $0x128] sm:$0xff]
    %v79 = vld [vmem:[%s4 + $0x130] sm:$0xff]
    %v80 = vld [vmem:[%s4 + $0x138] sm:$0xff]
    %81 = vrot.lane.b32.xlu0 %v37, 17
    %v82 = vpop.permute.xlu0 %81
    %83 = vrot.lane.b32.xlu0 %v38, 17
    %v84 = vpop.permute.xlu0 %83
    %85 = vrot.lane.b32.xlu0 %v39, 17
    %v86 = vpop.permute.xlu0 %85
    %87 = vrot.lane.b32.xlu0 %v40, 17
    %v88 = vpop.permute.xlu0 %87
    %v89 = vlaneseq
    %v90 = vand.u32 %v89, 127
    %vm91 = vcmp.lt.s32.totalorder %v90, 17
    %v92 = vsel %vm91, %v86, %v88
    %v93 = vsel %vm91, %v84, %v86
    %v94 = vsel %vm91, %v82, %v84
    %v95 = vsel %vm91, %v88, %v82
    %96 = vrot.lane.b32.xlu0 %v37, 16
    %v97 = vpop.permute.xlu0 %96
    %98 = vrot.lane.b32.xlu0 %v38, 16
    %v99 = vpop.permute.xlu0 %98
    %100 = vrot.lane.b32.xlu0 %v39, 16
    %v101 = vpop.permute.xlu0 %100
    %102 = vrot.lane.b32.xlu0 %v40, 16
    %v103 = vpop.permute.xlu0 %102
    %vm104 = vcmp.lt.s32.totalorder %v90, 16
    %v105 = vsel %vm104, %v101, %v103
    %v106 = vsel %vm104, %v99, %v101
    %v107 = vsel %vm104, %v97, %v99
    %v108 = vsel %vm104, %v103, %v97
    %109 = vrot.lane.b32.xlu0 %v37, 15
    %v110 = vpop.permute.xlu0 %109
    %111 = vrot.lane.b32.xlu0 %v38, 15
    %v112 = vpop.permute.xlu0 %111
    %113 = vrot.lane.b32.xlu0 %v39, 15
    %v114 = vpop.permute.xlu0 %113
    %115 = vrot.lane.b32.xlu0 %v40, 15
    %v116 = vpop.permute.xlu0 %115
    %vm117 = vcmp.lt.s32.totalorder %v90, 15
    %v118 = vsel %vm117, %v114, %v116
    %v119 = vsel %vm117, %v112, %v114
    %v120 = vsel %vm117, %v110, %v112
    %v121 = vsel %vm117, %v116, %v110
    %122 = vrot.lane.b32.xlu0 %v37, 1
    %v123 = vpop.permute.xlu0 %122
    %124 = vrot.lane.b32.xlu0 %v38, 1
    %v125 = vpop.permute.xlu0 %124
    %126 = vrot.lane.b32.xlu0 %v39, 1
    %v127 = vpop.permute.xlu0 %126
    %128 = vrot.lane.b32.xlu0 %v40, 1
    %v129 = vpop.permute.xlu0 %128
    %vm130 = vcmp.lt.s32.totalorder %v90, 1
    %v131 = vsel %vm130, %v127, %v129
    %v132 = vsel %vm130, %v125, %v127
    %v133 = vsel %vm130, %v123, %v125
    %v134 = vsel %vm130, %v129, %v123
    %135 = vrot.lane.b32.xlu0 %v37, 127
    %v136 = vpop.permute.xlu0 %135
    %137 = vrot.lane.b32.xlu0 %v38, 127
    %v138 = vpop.permute.xlu0 %137
    %139 = vrot.lane.b32.xlu0 %v39, 127
    %v140 = vpop.permute.xlu0 %139
    %141 = vrot.lane.b32.xlu0 %v40, 127
    %v142 = vpop.permute.xlu0 %141
    %vm143 = vcmp.lt.s32.totalorder %v90, 127
    %v144 = vsel %vm143, %v140, %v142
    %v145 = vsel %vm143, %v138, %v140
    %v146 = vsel %vm143, %v136, %v138
    %v147 = vsel %vm143, %v142, %v136
    %148 = vrot.lane.b32.xlu0 %v37, 113
    %v149 = vpop.permute.xlu0 %148
    %150 = vrot.lane.b32.xlu0 %v38, 113
    %v151 = vpop.permute.xlu0 %150
    %152 = vrot.lane.b32.xlu0 %v39, 113
    %v153 = vpop.permute.xlu0 %152
    %154 = vrot.lane.b32.xlu0 %v40, 113
    %v155 = vpop.permute.xlu0 %154
    %vm156 = vcmp.lt.s32.totalorder %v90, 113
    %v157 = vsel %vm156, %v153, %v155
    %v158 = vsel %vm156, %v151, %v153
    %v159 = vsel %vm156, %v149, %v151
    %v160 = vsel %vm156, %v155, %v149
    %161 = vrot.lane.b32.xlu0 %v37, 112
    %v162 = vpop.permute.xlu0 %161
    %163 = vrot.lane.b32.xlu0 %v38, 112
    %v164 = vpop.permute.xlu0 %163
    %165 = vrot.lane.b32.xlu0 %v39, 112
    %v166 = vpop.permute.xlu0 %165
    %167 = vrot.lane.b32.xlu0 %v40, 112
    %v168 = vpop.permute.xlu0 %167
    %vm169 = vcmp.lt.s32.totalorder %v90, 112
    %v170 = vsel %vm169, %v166, %v168
    %v171 = vsel %vm169, %v164, %v166
    %v172 = vsel %vm169, %v162, %v164
    %v173 = vsel %vm169, %v168, %v162
    %174 = vrot.lane.b32.xlu0 %v37, 111
    %v175 = vpop.permute.xlu0 %174
    %176 = vrot.lane.b32.xlu0 %v38, 111
    %v177 = vpop.permute.xlu0 %176
    %178 = vrot.lane.b32.xlu0 %v39, 111
    %v179 = vpop.permute.xlu0 %178
    %180 = vrot.lane.b32.xlu0 %v40, 111
    %v181 = vpop.permute.xlu0 %180
    %vm182 = vcmp.lt.s32.totalorder %v90, 111
    %v183 = vsel %vm182, %v179, %v181
    %v184 = vsel %vm182, %v177, %v179
    %v185 = vsel %vm182, %v175, %v177
    %v186 = vsel %vm182, %v181, %v175
    %v187 = vmul.f32 %v95, %v41
    %v188 = vmul.f32 %v94, %v42
    %v189 = vmul.f32 %v93, %v43
    %v190 = vmul.f32 %v92, %v44
    %v191 = vmul.f32 %v108, %v45
    %v192 = vmul.f32 %v107, %v46
    %v193 = vmul.f32 %v106, %v47
    %v194 = vmul.f32 %v105, %v48
    %v195 = vmul.f32 %v121, %v49
    %v196 = vmul.f32 %v120, %v50
    %v197 = vmul.f32 %v119, %v51
    %v198 = vmul.f32 %v118, %v52
    %v199 = vmul.f32 %v134, %v53
    %v200 = vmul.f32 %v133, %v54
    %v201 = vmul.f32 %v132, %v55
    %v202 = vmul.f32 %v131, %v56
    %v203 = vmul.f32 %v37, %v57
    %v204 = vmul.f32 %v38, %v58
    %v205 = vmul.f32 %v39, %v59
    %v206 = vmul.f32 %v40, %v60
    %v207 = vmul.f32 %v146, %v61
    %v208 = vmul.f32 %v145, %v62
    %v209 = vmul.f32 %v144, %v63
    %v210 = vmul.f32 %v147, %v64
    %v211 = vmul.f32 %v159, %v65
    %v212 = vmul.f32 %v158, %v66
    %v213 = vmul.f32 %v157, %v67
    %v214 = vmul.f32 %v160, %v68
    %v215 = vmul.f32 %v172, %v69
    %v216 = vmul.f32 %v171, %v70
    %v217 = vmul.f32 %v170, %v71
    %v218 = vmul.f32 %v173, %v72
    %v219 = vmul.f32 %v185, %v73
    %v220 = vmul.f32 %v184, %v74
    %v221 = vmul.f32 %v183, %v75
    %v222 = vmul.f32 %v186, %v76
    %v223 = vpack.c.bf16 %v191, %v187
    %v224 = vpack.c.bf16 %v192, %v188
    %v225 = vpack.c.bf16 %v193, %v189
    %v226 = vpack.c.bf16 %v194, %v190
    %v227 = vpack.c.bf16 %v199, %v195
    %v228 = vpack.c.bf16 %v200, %v196
    %v229 = vpack.c.bf16 %v201, %v197
    %v230 = vpack.c.bf16 %v202, %v198
    %v231 = vpack.c.bf16 %v207, %v203
    %v232 = vpack.c.bf16 %v208, %v204
    %v233 = vpack.c.bf16 %v209, %v205
    %v234 = vpack.c.bf16 %v210, %v206
    %v235 = vpack.c.bf16 %v215, %v211
    %v236 = vpack.c.bf16 %v216, %v212
    %v237 = vpack.c.bf16 %v217, %v213
    %v238 = vpack.c.bf16 %v218, %v214
    %v239 = vpack.c.bf16 %v77, %v219
    %v240 = vpack.c.bf16 %v78, %v220
    %v241 = vpack.c.bf16 %v79, %v221
    %v242 = vpack.c.bf16 %v80, %v222
    %v243 = vld [vmem:[%s1] sm:$0xf]
    %vm244 = vcmask 654336
    %v246 = vsel %vm244, %v243, 0
    %248 = vmatpush.bf16.msra.mxu0 0
    %249 = vmatpush.bf16.msra.mxu0 0
    %250 = vmatpush.bf16.msra.mxu0 0
    %251 = vmatpush.bf16.msra.mxu0 %v239
    %252 = vmatpush.bf16.msra.mxu0 %v235
    %253 = vmatpush.bf16.msra.mxu0 %v231
    %254 = vmatpush.bf16.msra.mxu0 %v227
    %255 = vmatpush.bf16.msra.mxu0 %v223
    %256 = vmatmul.bf16.gmra.mxu0 %v246
    %v257 = vpop.f32.mrf.mxu0
    %v258 = vadd.f32 0.0, %v257
    %v259 = vpop.f32.mrf.mxu0
    %260 = vdwg.mxu0
    %261 = vmatpush.bf16.msra.mxu0 0
    %262 = vmatpush.bf16.msra.mxu0 0
    %263 = vmatpush.bf16.msra.mxu0 0
    %264 = vmatpush.bf16.msra.mxu0 %v240
    %265 = vmatpush.bf16.msra.mxu0 %v236
    %266 = vmatpush.bf16.msra.mxu0 %v232
    %267 = vmatpush.bf16.msra.mxu0 %v228
    %268 = vmatpush.bf16.msra.mxu0 %v224
    %269 = vmatmul.bf16.gmra.mxu0 %v246
    %v270 = vpop.f32.mrf.mxu0
    %v271 = vadd.f32 0.0, %v270
    %v272 = vpop.f32.mrf.mxu0
    %273 = vdwg.mxu0
    %274 = vmatpush.bf16.msra.mxu0 0
    %275 = vmatpush.bf16.msra.mxu0 0
    %276 = vmatpush.bf16.msra.mxu0 0
    %277 = vmatpush.bf16.msra.mxu0 %v241
    %278 = vmatpush.bf16.msra.mxu0 %v237
    %279 = vmatpush.bf16.msra.mxu0 %v233
    %280 = vmatpush.bf16.msra.mxu0 %v229
    %281 = vmatpush.bf16.msra.mxu0 %v225
    %282 = vmatmul.bf16.gmra.mxu0 %v246
    %v283 = vpop.f32.mrf.mxu0
    %v284 = vadd.f32 0.0, %v283
    %v285 = vpop.f32.mrf.mxu0
    %286 = vdwg.mxu0
    %287 = vmatpush.bf16.msra.mxu0 0
    %288 = vmatpush.bf16.msra.mxu0 0
    %289 = vmatpush.bf16.msra.mxu0 0
    %290 = vmatpush.bf16.msra.mxu0 %v242
    %291 = vmatpush.bf16.msra.mxu0 %v238
    %292 = vmatpush.bf16.msra.mxu0 %v234
    %293 = vmatpush.bf16.msra.mxu0 %v230
    %294 = vmatpush.bf16.msra.mxu0 %v226
    %295 = vmatmul.bf16.gmra.mxu0 %v246
    %v296 = vpop.f32.mrf.mxu0
    %v297 = vadd.f32 0.0, %v296
    %v298 = vpop.f32.mrf.mxu0
    %299 = vdwg.mxu0
    %v300 = vmax.f32 %v258, 0.0
    %v301 = vmax.f32 %v271, 0.0
    %v302 = vmax.f32 %v284, 0.0
    %v303 = vmax.f32 %v297, 0.0
    %304 = vrot.lane.b32.xlu0 %v300, 17
    %v305 = vpop.permute.xlu0 %304
    %306 = vrot.lane.b32.xlu0 %v301, 17
    %v307 = vpop.permute.xlu0 %306
    %308 = vrot.lane.b32.xlu0 %v302, 17
    %v309 = vpop.permute.xlu0 %308
    %310 = vrot.lane.b32.xlu0 %v303, 17
    %v311 = vpop.permute.xlu0 %310
    %v312 = vsel %vm91, %v309, %v311
    %v313 = vsel %vm91, %v307, %v309
    %v314 = vsel %vm91, %v305, %v307
    %v315 = vsel %vm91, %v311, %v305
    %316 = vrot.lane.b32.xlu0 %v300, 16
    %v317 = vpop.permute.xlu0 %316
    %318 = vrot.lane.b32.xlu0 %v301, 16
    %v319 = vpop.permute.xlu0 %318
    %320 = vrot.lane.b32.xlu0 %v302, 16
    %v321 = vpop.permute.xlu0 %320
    %322 = vrot.lane.b32.xlu0 %v303, 16
    %v323 = vpop.permute.xlu0 %322
    %v324 = vsel %vm104, %v321, %v323
    %v325 = vsel %vm104, %v319, %v321
    %v326 = vsel %vm104, %v317, %v319
    %v327 = vsel %vm104, %v323, %v317
    %328 = vrot.lane.b32.xlu0 %v300, 15
    %v329 = vpop.permute.xlu0 %328
    %330 = vrot.lane.b32.xlu0 %v301, 15
    %v331 = vpop.permute.xlu0 %330
    %332 = vrot.lane.b32.xlu0 %v302, 15
    %v333 = vpop.permute.xlu0 %332
    %334 = vrot.lane.b32.xlu0 %v303, 15
    %v335 = vpop.permute.xlu0 %334
    %v336 = vsel %vm117, %v333, %v335
    %v337 = vsel %vm117, %v331, %v333
    %v338 = vsel %vm117, %v329, %v331
    %v339 = vsel %vm117, %v335, %v329
    %340 = vrot.lane.b32.xlu0 %v300, 1
    %v341 = vpop.permute.xlu0 %340
    %342 = vrot.lane.b32.xlu0 %v301, 1
    %v343 = vpop.permute.xlu0 %342
    %344 = vrot.lane.b32.xlu0 %v302, 1
    %v345 = vpop.permute.xlu0 %344
    %346 = vrot.lane.b32.xlu0 %v303, 1
    %v347 = vpop.permute.xlu0 %346
    %v348 = vsel %vm130, %v345, %v347
    %v349 = vsel %vm130, %v343, %v345
    %v350 = vsel %vm130, %v341, %v343
    %v351 = vsel %vm130, %v347, %v341
    %352 = vrot.lane.b32.xlu0 %v300, 127
    %v353 = vpop.permute.xlu0 %352
    %354 = vrot.lane.b32.xlu0 %v301, 127
    %v355 = vpop.permute.xlu0 %354
    %356 = vrot.lane.b32.xlu0 %v302, 127
    %v357 = vpop.permute.xlu0 %356
    %358 = vrot.lane.b32.xlu0 %v303, 127
    %v359 = vpop.permute.xlu0 %358
    %v360 = vsel %vm143, %v357, %v359
    %v361 = vsel %vm143, %v355, %v357
    %v362 = vsel %vm143, %v353, %v355
    %v363 = vsel %vm143, %v359, %v353
    %364 = vrot.lane.b32.xlu0 %v300, 113
    %v365 = vpop.permute.xlu0 %364
    %366 = vrot.lane.b32.xlu0 %v301, 113
    %v367 = vpop.permute.xlu0 %366
    %368 = vrot.lane.b32.xlu0 %v302, 113
    %v369 = vpop.permute.xlu0 %368
    %370 = vrot.lane.b32.xlu0 %v303, 113
    %v371 = vpop.permute.xlu0 %370
    %v372 = vsel %vm156, %v369, %v371
    %v373 = vsel %vm156, %v367, %v369
    %v374 = vsel %vm156, %v365, %v367
    %v375 = vsel %vm156, %v371, %v365
    %376 = vrot.lane.b32.xlu0 %v300, 112
    %v377 = vpop.permute.xlu0 %376
    %378 = vrot.lane.b32.xlu0 %v301, 112
    %v379 = vpop.permute.xlu0 %378
    %380 = vrot.lane.b32.xlu0 %v302, 112
    %v381 = vpop.permute.xlu0 %380
    %382 = vrot.lane.b32.xlu0 %v303, 112
    %v383 = vpop.permute.xlu0 %382
    %v384 = vsel %vm169, %v381, %v383
    %v385 = vsel %vm169, %v379, %v381
    %v386 = vsel %vm169, %v377, %v379
    %v387 = vsel %vm169, %v383, %v377
    %388 = vrot.lane.b32.xlu0 %v300, 111
    %v389 = vpop.permute.xlu0 %388
    %390 = vrot.lane.b32.xlu0 %v301, 111
    %v391 = vpop.permute.xlu0 %390
    %392 = vrot.lane.b32.xlu0 %v302, 111
    %v393 = vpop.permute.xlu0 %392
    %394 = vrot.lane.b32.xlu0 %v303, 111
    %v395 = vpop.permute.xlu0 %394
    %v396 = vsel %vm182, %v393, %v395
    %v397 = vsel %vm182, %v391, %v393
    %v398 = vsel %vm182, %v389, %v391
    %v399 = vsel %vm182, %v395, %v389
    %v400 = vmul.f32 %v315, %v41
    %v401 = vmul.f32 %v314, %v42
    %v402 = vmul.f32 %v313, %v43
    %v403 = vmul.f32 %v312, %v44
    %v404 = vmul.f32 %v327, %v45
    %v405 = vmul.f32 %v326, %v46
    %v406 = vmul.f32 %v325, %v47
    %v407 = vmul.f32 %v324, %v48
    %v408 = vmul.f32 %v339, %v49
    %v409 = vmul.f32 %v338, %v50
    %v410 = vmul.f32 %v337, %v51
    %v411 = vmul.f32 %v336, %v52
    %v412 = vmul.f32 %v351, %v53
    %v413 = vmul.f32 %v350, %v54
    %v414 = vmul.f32 %v349, %v55
    %v415 = vmul.f32 %v348, %v56
    %v416 = vmul.f32 %v300, %v57
    %v417 = vmul.f32 %v301, %v58
    %v418 = vmul.f32 %v302, %v59
    %v419 = vmul.f32 %v303, %v60
    %v420 = vmul.f32 %v362, %v61
    %v421 = vmul.f32 %v361, %v62
    %v422 = vmul.f32 %v360, %v63
    %v423 = vmul.f32 %v363, %v64
    %v424 = vmul.f32 %v374, %v65
    %v425 = vmul.f32 %v373, %v66
    %v426 = vmul.f32 %v372, %v67
    %v427 = vmul.f32 %v375, %v68
    %v428 = vmul.f32 %v386, %v69
    %v429 = vmul.f32 %v385, %v70
    %v430 = vmul.f32 %v384, %v71
    %v431 = vmul.f32 %v387, %v72
    %v432 = vmul.f32 %v398, %v73
    %v433 = vmul.f32 %v397, %v74
    %v434 = vmul.f32 %v396, %v75
    %v435 = vmul.f32 %v399, %v76
    %v436 = vpack.c.bf16 %v404, %v400
    %v437 = vpack.c.bf16 %v405, %v401
    %v438 = vpack.c.bf16 %v406, %v402
    %v439 = vpack.c.bf16 %v407, %v403
    %v440 = vpack.c.bf16 %v412, %v408
    %v441 = vpack.c.bf16 %v413, %v409
    %v442 = vpack.c.bf16 %v414, %v410
    %v443 = vpack.c.bf16 %v415, %v411
    %v444 = vpack.c.bf16 %v420, %v416
    %v445 = vpack.c.bf16 %v421, %v417
    %v446 = vpack.c.bf16 %v422, %v418
    %v447 = vpack.c.bf16 %v423, %v419
    %v448 = vpack.c.bf16 %v428, %v424
    %v449 = vpack.c.bf16 %v429, %v425
    %v450 = vpack.c.bf16 %v430, %v426
    %v451 = vpack.c.bf16 %v431, %v427
    %v452 = vpack.c.bf16 %v77, %v432
    %v453 = vpack.c.bf16 %v78, %v433
    %v454 = vpack.c.bf16 %v79, %v434
    %v455 = vpack.c.bf16 %v80, %v435
    %v456 = vld [vmem:[#allocation2] sm:$0xf]
    %v457 = vld [vmem:[#allocation2 + $0x4] sm:$0xf]
    %v458 = vld [vmem:[#allocation2 + $0x8] sm:$0xf]
    %v459 = vld [vmem:[#allocation2 + $0xc] sm:$0xf]
    %v460 = vld [vmem:[#allocation2 + $0x10] sm:$0xf]
    %v461 = vld [vmem:[#allocation2 + $0x14] sm:$0xf]
    %v462 = vld [vmem:[#allocation2 + $0x18] sm:$0xf]
    %v463 = vld [vmem:[#allocation2 + $0x1c] sm:$0xf]
    %v464 = vld [vmem:[#allocation2 + $0x20] sm:$0xf]
    %v465 = vld [vmem:[#allocation2 + $0x24] sm:$0xf]
    %v466 = vld [vmem:[#allocation2 + $0x28] sm:$0xf]
    %v467 = vld [vmem:[#allocation2 + $0x2c] sm:$0xf]
    %v468 = vld [vmem:[#allocation2 + $0x30] sm:$0xf]
    %v469 = vld [vmem:[#allocation2 + $0x34] sm:$0xf]
    %v470 = vld [vmem:[#allocation2 + $0x38] sm:$0xf]
    %v471 = vld [vmem:[#allocation2 + $0x3c] sm:$0xf]
    %v472 = vld [vmem:[#allocation2 + $0x40] sm:$0xf]
    %v473 = vld [vmem:[#allocation2 + $0x44] sm:$0xf]
    %v474 = vld [vmem:[#allocation2 + $0x48] sm:$0xf]
    %v475 = vld [vmem:[#allocation2 + $0x4c] sm:$0xf]
    %v476 = vld [vmem:[#allocation2 + $0x50] sm:$0xf]
    %v477 = vld [vmem:[#allocation2 + $0x54] sm:$0xf]
    %v478 = vld [vmem:[#allocation2 + $0x58] sm:$0xf]
    %v479 = vld [vmem:[#allocation2 + $0x5c] sm:$0xf]
    %v480 = vld [vmem:[#allocation2 + $0x60] sm:$0xf]
    %v481 = vld [vmem:[#allocation2 + $0x64] sm:$0xf]
    %v482 = vld [vmem:[#allocation2 + $0x68] sm:$0xf]
    %v483 = vld [vmem:[#allocation2 + $0x6c] sm:$0xf]
    %v484 = vld [vmem:[#allocation2 + $0x70] sm:$0xf]
    %v485 = vld [vmem:[#allocation2 + $0x74] sm:$0xf]
    %v486 = vld [vmem:[#allocation2 + $0x78] sm:$0xf]
    %v487 = vld [vmem:[#allocation2 + $0x7c] sm:$0xf]
    %v488 = vld [vmem:[#allocation2 + $0x80] sm:$0xf]
    %v489 = vld [vmem:[#allocation2 + $0x84] sm:$0xf]
    %v490 = vld [vmem:[#allocation2 + $0x88] sm:$0xf]
    %v491 = vld [vmem:[#allocation2 + $0x8c] sm:$0xf]
    %v492 = vld [vmem:[#allocation2 + $0x90] sm:$0xf]
    %v493 = vld [vmem:[#allocation2 + $0x94] sm:$0xf]
    %v494 = vld [vmem:[#allocation2 + $0x98] sm:$0xf]
    %v495 = vld [vmem:[#allocation2 + $0x9c] sm:$0xf]
    %v496 = vld [vmem:[#allocation2 + $0xa0] sm:$0xf]
    %v497 = vld [vmem:[#allocation2 + $0xa4] sm:$0xf]
    %v498 = vld [vmem:[#allocation2 + $0xa8] sm:$0xf]
    %v499 = vld [vmem:[#allocation2 + $0xac] sm:$0xf]
    %v500 = vld [vmem:[#allocation2 + $0xb0] sm:$0xf]
    %v501 = vld [vmem:[#allocation2 + $0xb4] sm:$0xf]
    %v502 = vld [vmem:[#allocation2 + $0xb8] sm:$0xf]
    %v503 = vld [vmem:[#allocation2 + $0xbc] sm:$0xf]
    %v504 = vld [vmem:[#allocation2 + $0xc0] sm:$0xf]
    %v505 = vld [vmem:[#allocation2 + $0xc4] sm:$0xf]
    %v506 = vld [vmem:[#allocation2 + $0xc8] sm:$0xf]
    %v507 = vld [vmem:[#allocation2 + $0xcc] sm:$0xf]
    %v508 = vld [vmem:[#allocation2 + $0xd0] sm:$0xf]
    %v509 = vld [vmem:[#allocation2 + $0xd4] sm:$0xf]
    %v510 = vld [vmem:[#allocation2 + $0xd8] sm:$0xf]
    %v511 = vld [vmem:[#allocation2 + $0xdc] sm:$0xf]
    %v512 = vld [vmem:[#allocation2 + $0xe0] sm:$0xf]
    %v513 = vld [vmem:[#allocation2 + $0xe4] sm:$0xf]
    %v514 = vld [vmem:[#allocation2 + $0xe8] sm:$0xf]
    %v515 = vld [vmem:[#allocation2 + $0xec] sm:$0xf]
    %v516 = vld [vmem:[#allocation2 + $0xf0] sm:$0xf]
    %v517 = vld [vmem:[#allocation2 + $0xf4] sm:$0xf]
    %v518 = vld [vmem:[#allocation2 + $0xf8] sm:$0xf]
    %v519 = vld [vmem:[#allocation2 + $0xfc] sm:$0xf]
    %v584 = vunpack.c.l.b16 %v456
    %v585 = vunpack.c.l.b16 %v457
    %v586 = vunpack.c.l.b16 %v458
    %v587 = vunpack.c.l.b16 %v459
    %v588 = vunpack.c.l.b16 %v460
    %v589 = vunpack.c.l.b16 %v461
    %v590 = vunpack.c.l.b16 %v462
    %v591 = vunpack.c.l.b16 %v463
    %v592 = vunpack.c.l.b16 %v464
    %v593 = vunpack.c.l.b16 %v465
    %v594 = vunpack.c.l.b16 %v466
    %v595 = vunpack.c.l.b16 %v467
    %v596 = vunpack.c.l.b16 %v468
    %v597 = vunpack.c.l.b16 %v469
    %v598 = vunpack.c.l.b16 %v470
    %v599 = vunpack.c.l.b16 %v471
    %v600 = vunpack.c.l.b16 %v472
    %v601 = vunpack.c.l.b16 %v473
    %v602 = vunpack.c.l.b16 %v474
    %v603 = vunpack.c.l.b16 %v475
    %v604 = vunpack.c.l.b16 %v476
    %v605 = vunpack.c.l.b16 %v477
    %v606 = vunpack.c.l.b16 %v478
    %v607 = vunpack.c.l.b16 %v479
    %v608 = vunpack.c.l.b16 %v480
    %v609 = vunpack.c.l.b16 %v481
    %v610 = vunpack.c.l.b16 %v482
    %v611 = vunpack.c.l.b16 %v483
    %v612 = vunpack.c.l.b16 %v484
    %v613 = vunpack.c.l.b16 %v485
    %v614 = vunpack.c.l.b16 %v486
    %v615 = vunpack.c.l.b16 %v487
    %v616 = vunpack.c.l.b16 %v488
    %v617 = vunpack.c.l.b16 %v489
    %v618 = vunpack.c.l.b16 %v490
    %v619 = vunpack.c.l.b16 %v491
    %v620 = vunpack.c.l.b16 %v492
    %v621 = vunpack.c.l.b16 %v493
    %v622 = vunpack.c.l.b16 %v494
    %v623 = vunpack.c.l.b16 %v495
    %v624 = vunpack.c.l.b16 %v496
    %v625 = vunpack.c.l.b16 %v497
    %v626 = vunpack.c.l.b16 %v498
    %v627 = vunpack.c.l.b16 %v499
    %v628 = vunpack.c.l.b16 %v500
    %v629 = vunpack.c.l.b16 %v501
    %v630 = vunpack.c.l.b16 %v502
    %v631 = vunpack.c.l.b16 %v503
    %v632 = vunpack.c.l.b16 %v504
    %v633 = vunpack.c.l.b16 %v505
    %v634 = vunpack.c.l.b16 %v506
    %v635 = vunpack.c.l.b16 %v507
    %v636 = vunpack.c.l.b16 %v508
    %v637 = vunpack.c.l.b16 %v509
    %v638 = vunpack.c.l.b16 %v510
    %v639 = vunpack.c.l.b16 %v511
    %v640 = vunpack.c.l.b16 %v512
    %v641 = vunpack.c.l.b16 %v513
    %v642 = vunpack.c.l.b16 %v514
    %v643 = vunpack.c.l.b16 %v515
    %v644 = vunpack.c.l.b16 %v516
    %v645 = vunpack.c.l.b16 %v517
    %v646 = vunpack.c.l.b16 %v518
    %v647 = vunpack.c.l.b16 %v519
    %v648 = vpack.c.b16 %v585, %v584
    %v649 = vpack.c.b16 %v587, %v586
    %v650 = vpack.c.b16 %v589, %v588
    %v651 = vpack.c.b16 %v591, %v590
    %v652 = vpack.c.b16 %v593, %v592
    %v653 = vpack.c.b16 %v595, %v594
    %v654 = vpack.c.b16 %v597, %v596
    %v655 = vpack.c.b16 %v599, %v598
    %v656 = vpack.c.b16 %v601, %v600
    %v657 = vpack.c.b16 %v603, %v602
    %v658 = vpack.c.b16 %v605, %v604
    %v659 = vpack.c.b16 %v607, %v606
    %v660 = vpack.c.b16 %v609, %v608
    %v661 = vpack.c.b16 %v611, %v610
    %v662 = vpack.c.b16 %v613, %v612
    %v663 = vpack.c.b16 %v615, %v614
    %v664 = vpack.c.b16 %v617, %v616
    %v665 = vpack.c.b16 %v619, %v618
    %v666 = vpack.c.b16 %v621, %v620
    %v667 = vpack.c.b16 %v623, %v622
    %v668 = vpack.c.b16 %v625, %v624
    %v669 = vpack.c.b16 %v627, %v626
    %v670 = vpack.c.b16 %v629, %v628
    %v671 = vpack.c.b16 %v631, %v630
    %v672 = vpack.c.b16 %v633, %v632
    %v673 = vpack.c.b16 %v635, %v634
    %v674 = vpack.c.b16 %v637, %v636
    %v675 = vpack.c.b16 %v639, %v638
    %v676 = vpack.c.b16 %v641, %v640
    %v677 = vpack.c.b16 %v643, %v642
    %v678 = vpack.c.b16 %v645, %v644
    %v679 = vpack.c.b16 %v647, %v646
    %712 = vmatpush.bf16.msra.mxu0 %v655
    %713 = vmatpush.bf16.msra.mxu0 %v654
    %714 = vmatpush.bf16.msra.mxu0 %v653
    %715 = vmatpush.bf16.msra.mxu0 %v652
    %716 = vmatpush.bf16.msra.mxu0 %v651
    %717 = vmatpush.bf16.msra.mxu0 %v650
    %718 = vmatpush.bf16.msra.mxu0 %v649
    %719 = vmatpush.bf16.msra.mxu0 %v648
    %720 = vmatmul.bf16.gmra.mxu0 %v436
    %v721 = vpop.f32.mrf.mxu0
    %v722 = vadd.f32 0.0, %v721
    %v723 = vpop.f32.mrf.mxu0
    %v724 = vadd.f32 0.0, %v723
    %725 = vmatmul.bf16.gmra.mxu0 %v440
    %v726 = vpop.f32.mrf.mxu0
    %v727 = vadd.f32 0.0, %v726
    %v728 = vpop.f32.mrf.mxu0
    %v729 = vadd.f32 0.0, %v728
    %730 = vmatmul.bf16.gmra.mxu0 %v444
    %v731 = vpop.f32.mrf.mxu0
    %v732 = vadd.f32 0.0, %v731
    %v733 = vpop.f32.mrf.mxu0
    %v734 = vadd.f32 0.0, %v733
    %735 = vmatmul.bf16.gmra.mxu0 %v448
    %v736 = vpop.f32.mrf.mxu0
    %v737 = vadd.f32 0.0, %v736
    %v738 = vpop.f32.mrf.mxu0
    %v739 = vadd.f32 0.0, %v738
    %740 = vmatmul.bf16.gmra.mxu0 %v452
    %v741 = vpop.f32.mrf.mxu0
    %v742 = vadd.f32 0.0, %v741
    %v743 = vpop.f32.mrf.mxu0
    %v744 = vadd.f32 0.0, %v743
    %745 = vdwg.mxu0
    %746 = vmatpush.bf16.msra.mxu0 %v663
    %747 = vmatpush.bf16.msra.mxu0 %v662
    %748 = vmatpush.bf16.msra.mxu0 %v661
    %749 = vmatpush.bf16.msra.mxu0 %v660
    %750 = vmatpush.bf16.msra.mxu0 %v659
    %751 = vmatpush.bf16.msra.mxu0 %v658
    %752 = vmatpush.bf16.msra.mxu0 %v657
    %753 = vmatpush.bf16.msra.mxu0 %v656
    %754 = vmatmul.bf16.gmra.mxu0 %v437
    %v755 = vpop.f32.mrf.mxu0
    %v756 = vadd.f32 %v722, %v755
    %v757 = vpop.f32.mrf.mxu0
    %v758 = vadd.f32 %v724, %v757
    %759 = vmatmul.bf16.gmra.mxu0 %v441
    %v760 = vpop.f32.mrf.mxu0
    %v761 = vadd.f32 %v727, %v760
    %v762 = vpop.f32.mrf.mxu0
    %v763 = vadd.f32 %v729, %v762
    %764 = vmatmul.bf16.gmra.mxu0 %v445
    %v765 = vpop.f32.mrf.mxu0
    %v766 = vadd.f32 %v732, %v765
    %v767 = vpop.f32.mrf.mxu0
    %v768 = vadd.f32 %v734, %v767
    %769 = vmatmul.bf16.gmra.mxu0 %v449
    %v770 = vpop.f32.mrf.mxu0
    %v771 = vadd.f32 %v737, %v770
    %v772 = vpop.f32.mrf.mxu0
    %v773 = vadd.f32 %v739, %v772
    %774 = vmatmul.bf16.gmra.mxu0 %v453
    %v775 = vpop.f32.mrf.mxu0
    %v776 = vadd.f32 %v742, %v775
    %v777 = vpop.f32.mrf.mxu0
    %v778 = vadd.f32 %v744, %v777
    %779 = vdwg.mxu0
    %780 = vmatpush.bf16.msra.mxu0 %v671
    %781 = vmatpush.bf16.msra.mxu0 %v670
    %782 = vmatpush.bf16.msra.mxu0 %v669
    %783 = vmatpush.bf16.msra.mxu0 %v668
    %784 = vmatpush.bf16.msra.mxu0 %v667
    %785 = vmatpush.bf16.msra.mxu0 %v666
    %786 = vmatpush.bf16.msra.mxu0 %v665
    %787 = vmatpush.bf16.msra.mxu0 %v664
    %788 = vmatmul.bf16.gmra.mxu0 %v438
    %v789 = vpop.f32.mrf.mxu0
    %v790 = vadd.f32 %v756, %v789
    %v791 = vpop.f32.mrf.mxu0
    %v792 = vadd.f32 %v758, %v791
    %793 = vmatmul.bf16.gmra.mxu0 %v442
    %v794 = vpop.f32.mrf.mxu0
    %v795 = vadd.f32 %v761, %v794
    %v796 = vpop.f32.mrf.mxu0
    %v797 = vadd.f32 %v763, %v796
    %798 = vmatmul.bf16.gmra.mxu0 %v446
    %v799 = vpop.f32.mrf.mxu0
    %v800 = vadd.f32 %v766, %v799
    %v801 = vpop.f32.mrf.mxu0
    %v802 = vadd.f32 %v768, %v801
    %803 = vmatmul.bf16.gmra.mxu0 %v450
    %v804 = vpop.f32.mrf.mxu0
    %v805 = vadd.f32 %v771, %v804
    %v806 = vpop.f32.mrf.mxu0
    %v807 = vadd.f32 %v773, %v806
    %808 = vmatmul.bf16.gmra.mxu0 %v454
    %v809 = vpop.f32.mrf.mxu0
    %v810 = vadd.f32 %v776, %v809
    %v811 = vpop.f32.mrf.mxu0
    %v812 = vadd.f32 %v778, %v811
    %813 = vdwg.mxu0
    %814 = vmatpush.bf16.msra.mxu0 %v679
    %815 = vmatpush.bf16.msra.mxu0 %v678
    %816 = vmatpush.bf16.msra.mxu0 %v677
    %817 = vmatpush.bf16.msra.mxu0 %v676
    %818 = vmatpush.bf16.msra.mxu0 %v675
    %819 = vmatpush.bf16.msra.mxu0 %v674
    %820 = vmatpush.bf16.msra.mxu0 %v673
    %821 = vmatpush.bf16.msra.mxu0 %v672
    %822 = vmatmul.bf16.gmra.mxu0 %v439
    %v823 = vpop.f32.mrf.mxu0
    %v824 = vadd.f32 %v790, %v823
    %v825 = vpop.f32.mrf.mxu0
    %v826 = vadd.f32 %v792, %v825
    %827 = vmatmul.bf16.gmra.mxu0 %v443
    %v828 = vpop.f32.mrf.mxu0
    %v829 = vadd.f32 %v795, %v828
    %v830 = vpop.f32.mrf.mxu0
    %v831 = vadd.f32 %v797, %v830
    %832 = vmatmul.bf16.gmra.mxu0 %v447
    %v833 = vpop.f32.mrf.mxu0
    %v834 = vadd.f32 %v800, %v833
    %v835 = vpop.f32.mrf.mxu0
    %v836 = vadd.f32 %v802, %v835
    %837 = vmatmul.bf16.gmra.mxu0 %v451
    %v838 = vpop.f32.mrf.mxu0
    %v839 = vadd.f32 %v805, %v838
    %v840 = vpop.f32.mrf.mxu0
    %v841 = vadd.f32 %v807, %v840
    %842 = vmatmul.bf16.gmra.mxu0 %v455
    %v843 = vpop.f32.mrf.mxu0
    %v844 = vadd.f32 %v810, %v843
    %v845 = vpop.f32.mrf.mxu0
    %v846 = vadd.f32 %v812, %v845
    %847 = vdwg.mxu0
    %v848 = vld [vmem:[%s2] sm:$0xf]
    %v849 = vld [vmem:[%s2 + $0x4] sm:$0xf]
    %v850 = vpack.c.bf16 %v826, %v824
    %v851 = vpack.c.bf16 %v831, %v829
    %v852 = vpack.c.bf16 %v836, %v834
    %v853 = vpack.c.bf16 %v841, %v839
    %v854 = vpack.c.bf16 %v846, %v844
    %v857 = vunpack.c.l.b16 %v848
    %v858 = vunpack.c.l.b16 %v849
    %v859 = vpack.c.b16 %v858, %v857
    %v861 = vsel %vm244, %v859, 0
    %863 = vmatpush.bf16.msra.mxu0 0
    %864 = vmatpush.bf16.msra.mxu0 0
    %865 = vmatpush.bf16.msra.mxu0 0
    %866 = vmatpush.bf16.msra.mxu0 %v854
    %867 = vmatpush.bf16.msra.mxu0 %v853
    %868 = vmatpush.bf16.msra.mxu0 %v852
    %869 = vmatpush.bf16.msra.mxu0 %v851
    %870 = vmatpush.bf16.msra.mxu0 %v850
    %871 = vmatmul.bf16.gmra.mxu0 %v861
    %v872 = vpop.f32.mrf.mxu0
    %v873 = vadd.f32 0.0, %v872
    %v874 = vpop.f32.mrf.mxu0
    %v875 = vadd.f32 0.0, %v874
    %876 = vdwg.mxu0
    %v877 = vmax.f32 %v873, 0.0
    %v878 = vmax.f32 %v875, 0.0
    %879 = vst [vmem:[%s5] sm:$0xff] %v877
    %880 = vst [vmem:[%s5 + $0x8] sm:$0xff] %v878
    // Predicated region
    $region26: #{backbone_forward.1} parent=1 // pred_check
      _
    $region27: #{backbone_forward.1} parent=1 // pred_check_branch
      %882 = sbr.rel (0) target = $region29
    $region28: #{backbone_forward.1} parent=1 // pred_region
      _
    $region29: #{backbone_forward.1} parent=1 // pred_fallthru
      _
    // Predicated region
    $region30: #{backbone_forward.1} parent=1 // pred_check
      _
    $region31: #{backbone_forward.1} parent=1 // pred_check_branch
      %884 = sbr.rel (0) target = $region33
    $region32: #{backbone_forward.1} parent=1 // pred_region
      _
    $region33: #{backbone_forward.1} parent=1 // pred_fallthru
      _
    %885 = vsyncpa [#allocation3], 1

</llo_original>
